<compile_context>
chip_gen: v5e
topology: v5e:2x2
jax: 0.10.0
libtpu: 0.0.40
codegen_flags: <defaults>
</compile_context>

<pallas_src>
import jax
import jax.numpy as jnp
from jax.experimental import pallas as pl
from jax.experimental.pallas import tpu as pltpu  # noqa: F401  (kept for TPU-specific tuning hooks)


def learnable_prototypes_forward(class_embeddings_weight: jax.Array) -> jax.Array:
    """Production path: Learnable_Prototypes.forward() is an identity on the weight."""
    return class_embeddings_weight


def _prototypes_copy_kernel(w_ref, o_ref):
    # Whole parameter is a single VMEM block; forward() is an identity,
    # so the kernel is a single full-tile store.
    o_ref[...] = w_ref[...]


@jax.jit
def learnable_prototypes_forward_pallas(class_embeddings_weight: jax.Array) -> jax.Array:
    """Pallas form of forward(): grid-less single-block copy (demo/test artifact)."""
    num_classes, feat_dim = class_embeddings_weight.shape
    return pl.pallas_call(
        _prototypes_copy_kernel,
        out_shape=jax.ShapeDtypeStruct((num_classes, feat_dim),
                                       class_embeddings_weight.dtype),
        # No grid, no index_maps: the whole (tiny) array is one block,
        # auto-DMA'd HBM -> VMEM -> HBM by pallas_call.
    )(class_embeddings_weight)


def init_learnable_prototypes(key, num_classes=7, feat_dim=256):
    """Deterministic parameter init matching nn.Embedding default: N(0, 1)."""
    return jax.random.normal(key, (num_classes, feat_dim), dtype=jnp.float32)


if __name__ == "__main__":
    key = jax.random.PRNGKey(0)
    num_classes, feat_dim = 7, 256

    # Parameters (deterministic) — the module's only state.
    class_embeddings_weight = init_learnable_prototypes(key, num_classes, feat_dim)

    # Pallas path (demo): single-block identity copy.
    out = learnable_prototypes_forward_pallas(class_embeddings_weight)
    out = jax.block_until_ready(out)

    # Reference / production path (identity — what endoSAM should actually use).
    out_ref = learnable_prototypes_forward(class_embeddings_weight)

    # Sanity checks: forward == embedding weight.
    assert out.shape == (num_classes, feat_dim)
    assert out.dtype == jnp.float32
    assert bool(jnp.allclose(out, out_ref)), "mismatch vs reference"

    print("KERNEL_OK")
</pallas_src>

<mosaic_0001>
module attributes {stable_mosaic.version = 11 : i64} {
  func.func @_prototypes_copy_kernel(%arg0: memref<7x256xf32, #tpu.memory_space<vmem>>, %arg1: memref<7x256xf32, #tpu.memory_space<vmem>>) attributes {dimension_semantics = [], scalar_prefetch = 0 : i64, scratch_operands = 0 : i64, tpu.core_type = #tpu.core_type<tc>} {
    %c0 = arith.constant 0 : index
    %c0_0 = arith.constant 0 : index
    %0 = vector.load %arg0[%c0, %c0_0] : memref<7x256xf32, #tpu.memory_space<vmem>>, vector<7x256xf32>
    %c0_1 = arith.constant 0 : index
    %c0_2 = arith.constant 0 : index
    %1 = vector.load %arg1[%c0_1, %c0_2] : memref<7x256xf32, #tpu.memory_space<vmem>>, vector<7x256xf32>
    tpu.vector_store %arg1[%c0_1, %c0_2], %0 {strides = array<i32>} : memref<7x256xf32, #tpu.memory_space<vmem>>, vector<7x256xf32>,
    return
  }
}

</mosaic_0001>

<llo_original>
// kernel: learnable_prototypes_forward_pallas.1
$region0: #{learnable_prototypes_forward_pallas.1}
  #allocation0 [shape = 'u32[]', space=smem, size = 0x4, offset = 0x4, fixed_abs, tag = 'smem constant byte address 0x4 - core index']
  #allocation1 [shape = 'u32[72,128]{1,0:T(1,128)}', space=vmem, size = 0x9000, scoped, tag = 'internal scratch']
  %s0 = inlined_call_operand.hbm [shape: f32[7,256], index: 0, kind: input, shape index: {}]
  %s1 = inlined_call_operand.hbm [shape: f32[7,256], index: 1, kind: output, shape index: {}]
  %s2 = sld [smem:[#allocation0]]
  $region18: #{learnable_prototypes_forward_pallas.1} parent=0
    _
  %s4 = ssub.s32 1, %s2
  %s5 = scalar_select 0, %s4, %s2
  $region1: #{learnable_prototypes_forward_pallas.1} parent=0
    #allocation2 [shape = 'u8[8192]{0}', space=vmem, size = 0x2000, scoped, tag = 'input window, operand 0, single buffered']
    #allocation3 [shape = 's32[1]{0}', space=sflag, size = 0x4, scoped, tag = 'scoped memory for learnable_prototypes_forward_pallas.1']
    #allocation4 [shape = 's32[1]{0}', space=sflag, size = 0x4, scoped, tag = 'scoped memory for learnable_prototypes_forward_pallas.1']
    #allocation5 [shape = 'u8[8192]{0}', space=vmem, size = 0x2000, scoped, tag = 'output window, operand 0, single buffered']
    %6 = vsyncpa [#allocation3], 0
    %7 = vsyncpa [#allocation4], 0
    // Predicated region
    $region2: #{learnable_prototypes_forward_pallas.1} parent=1 // pred_check
      _
    $region3: #{learnable_prototypes_forward_pallas.1} parent=1 // pred_check_branch
      %9 = sbr.rel (0) target = $region5
    $region4: #{learnable_prototypes_forward_pallas.1} parent=1 // pred_region
      %11 = vsyncadd [#allocation3], 0
      %s13 = sshll.u32 %s0, 4
      %s14 = int_to_ptr.hbm [resolvable:$true] %s13
      %s15 = sshll.u32 [#allocation2], 4
      %s16 = int_to_ptr.vmem [resolvable:$true] %s15
      %18 = dma.hbm_to_vmem [thread:$0]  %s14, 256, %s16, [#allocation3]
    $region5: #{learnable_prototypes_forward_pallas.1} parent=1 // pred_fallthru
      _
    // Predicated region
    $region6: #{learnable_prototypes_forward_pallas.1} parent=1 // pred_check
      _
    $region7: #{learnable_prototypes_forward_pallas.1} parent=1 // pred_check_branch
      %20 = sbr.rel (0) target = $region9
    $region8: #{learnable_prototypes_forward_pallas.1} parent=1 // pred_region
      %22 = dma.done [#allocation3], 256
    $region9: #{learnable_prototypes_forward_pallas.1} parent=1 // pred_fallthru
      _
    %v23 = vld [vmem:[#allocation2] sm:$0x7f]
    %v24 = vld [vmem:[#allocation2 + $0x8] sm:$0x7f]
    %25 = vst [vmem:[#allocation5] sm:$0x7f] %v23
    %26 = vst [vmem:[#allocation5 + $0x8] sm:$0x7f] %v24
    // Predicated region
    $region10: #{learnable_prototypes_forward_pallas.1} parent=1 // pred_check
      _
    $region11: #{learnable_prototypes_forward_pallas.1} parent=1 // pred_check_branch
      %28 = sbr.rel (0) target = $region13
    $region12: #{learnable_prototypes_forward_pallas.1} parent=1 // pred_region
      %30 = vsyncadd [#allocation4], 0
      %s32 = sshll.u32 [#allocation5], 4
      %s33 = int_to_ptr.vmem [resolvable:$true] %s32
      %s34 = sshll.u32 %s1, 4
      %s35 = int_to_ptr.hbm [resolvable:$true] %s34
      %37 = dma.vmem_to_hbm [thread:$0]  %s33, 256, %s35, [#allocation4]
    $region13: #{learnable_prototypes_forward_pallas.1} parent=1 // pred_fallthru
      _
    // Predicated region
    $region14: #{learnable_prototypes_forward_pallas.1} parent=1 // pred_check
      _
    $region15: #{learnable_prototypes_forward_pallas.1} parent=1 // pred_check_branch
      %39 = sbr.rel (0) target = $region17
    $region16: #{learnable_prototypes_forward_pallas.1} parent=1 // pred_region
      %41 = dma.done [#allocation4], 256
    $region17: #{learnable_prototypes_forward_pallas.1} parent=1 // pred_fallthru
      _
    %42 = vsyncpa [#allocation3], 1
    %43 = vsyncpa [#allocation4], 1

</llo_original>
